<compile_context>
chip_gen: v5e
topology: v5e:2x2
jax: 0.10.0
libtpu: 0.0.40
codegen_flags: <defaults>
</compile_context>

<pallas_src>
import functools

import jax
import jax.numpy as jnp
from jax.experimental import pallas as pl
from jax.experimental.pallas import tpu as pltpu


# -----------------------------------------------------------------------------
# Pallas kernel: broadcast the 1-D linspaces into 2-D meshgrid tiles
# -----------------------------------------------------------------------------
def _meshgrid_broadcast_kernel(x_ref, y_ref, xg_ref, yg_ref):
    # x_ref: (1, W)  -- x coordinate varies along lanes
    # y_ref: (TY, 1) -- y coordinate varies along sublanes (already offset per
    #                   tile by the BlockSpec index_map, so no iota math here)
    H, W = xg_ref.shape
    xg_ref[...] = jnp.broadcast_to(x_ref[...], (H, W))   # sublane broadcast
    yg_ref[...] = jnp.broadcast_to(y_ref[...], (H, W))   # lane broadcast


def _pick_tile_rows(y_nodes, x_nodes, vmem_budget_bytes=8 * 1024 * 1024):
    """Rows per tile: 2 f32 outputs x 2 pipeline buffers must fit the budget.

    8 MiB budget keeps the kernel well under the default scoped VMEM limit on
    all of v5e (16 MiB), v6e (32 MiB) and v7x (32 MiB scoped / 64 MiB phys).
    """
    bytes_per_row = 2 * 2 * x_nodes * 4
    max_rows = max(1, vmem_budget_bytes // bytes_per_row)
    if y_nodes <= max_rows:
        return y_nodes                      # single block covering full y axis
    return max((max_rows // 8) * 8, 8)      # sublane-aligned tile


def make_grids_pallas(x_linspace, y_linspace, *, tile_rows=None):
    """Returns (x_grid, y_grid), each (y_nodes, x_nodes) float32,
    matching torch.meshgrid(x_linspace, y_linspace, indexing='xy')."""
    x_nodes = x_linspace.shape[0]
    y_nodes = y_linspace.shape[0]
    # NOTE: keep x_nodes as the last (lane) axis; a multiple of 128 gives
    # unmasked lane-dense stores (biggest measured lever for store-bound
    # kernels).  Non-multiples still work (full-dim block), just masked.
    ty = tile_rows if tile_rows is not None else _pick_tile_rows(y_nodes, x_nodes)
    ty = min(ty, y_nodes)
    grid = (pl.cdiv(y_nodes, ty),)

    x_row = x_linspace.reshape(1, x_nodes).astype(jnp.float32)   # (1, W)
    y_col = y_linspace.reshape(y_nodes, 1).astype(jnp.float32)   # (H, 1)

    out_shape = (
        jax.ShapeDtypeStruct((y_nodes, x_nodes), jnp.float32),
        jax.ShapeDtypeStruct((y_nodes, x_nodes), jnp.float32),
    )
    grid_spec = pl.GridSpec(
        grid=grid,
        in_specs=[
            pl.BlockSpec((1, x_nodes), lambda i: (0, 0)),   # same x row every tile
            pl.BlockSpec((ty, 1), lambda i: (i, 0)),        # y rows for this tile
        ],
        out_specs=[
            pl.BlockSpec((ty, x_nodes), lambda i: (i, 0)),
            pl.BlockSpec((ty, x_nodes), lambda i: (i, 0)),
        ],
    )
    return pl.pallas_call(
        _meshgrid_broadcast_kernel,
        out_shape=out_shape,
        grid_spec=grid_spec,
        compiler_params=pltpu.CompilerParams(
            # "parallel": lets v7x's two TensorCores split the row tiles;
            # no-op on single-TC v5e/v6e.
            dimension_semantics=("parallel",)
        ),
    )(x_row, y_col)


# -----------------------------------------------------------------------------
# JAX mirror of the Element base class
# -----------------------------------------------------------------------------
class ElementJAX:
    """JAX/Pallas mirror of svetlanna Element (base optical element)."""

    def __init__(self, x_size, y_size, x_nodes, y_nodes, wavelength,
                 tile_rows=None):
        self._x_size = x_size
        self._y_size = y_size
        self._x_nodes = x_nodes
        self._y_nodes = y_nodes
        self._wavelength = wavelength
        # 1-D linspaces (same values as torch.linspace).  Downstream kernels
        # should prefer broadcasting these (or iota+FMA) on the fly instead of
        # re-reading the materialized 2-D grids from HBM.
        self._x_linspace = jnp.linspace(-x_size / 2, x_size / 2, x_nodes,
                                        dtype=jnp.float32)
        self._y_linspace = jnp.linspace(-y_size / 2, y_size / 2, y_nodes,
                                        dtype=jnp.float32)
        # Materialized 2-D grids (attributes of the original module), built by
        # a tiled, write-streaming Pallas kernel.
        self._x_grid, self._y_grid = make_grids_pallas(
            self._x_linspace, self._y_linspace, tile_rows=tile_rows
        )

    def forward(self, Ein):
        # TODO(synk): Element.forward is abstract in the PyTorch source (no
        # defined semantics); pass the field through unchanged.
        return Ein

    # TODO(synk): to_specs / __setattr__ parameter bookkeeping has no Pallas
    # equivalent (pure Python/nn.Parameter plumbing) and is omitted.


# -----------------------------------------------------------------------------
if __name__ == "__main__":
    # Small simulation parameters (physical sizes in mm, arbitrary units)
    x_size, y_size = 2.0, 1.0
    x_nodes, y_nodes = 256, 32        # lane axis = x_nodes (multiple of 128)
    wavelength = 0.5e-3

    # Force a small row tile (8) so the multi-tile "parallel" pipeline path is
    # exercised even at this demo size; production sizing uses _pick_tile_rows.
    elem = ElementJAX(x_size, y_size, x_nodes, y_nodes, wavelength,
                      tile_rows=8)

    xg = jax.block_until_ready(elem._x_grid)
    yg = jax.block_until_ready(elem._y_grid)

    # Reference: torch.meshgrid(x, y, indexing='xy') semantics.
    xg_ref, yg_ref = jnp.meshgrid(elem._x_linspace, elem._y_linspace,
                                  indexing="xy")
    assert xg.shape == (y_nodes, x_nodes) and yg.shape == (y_nodes, x_nodes)
    # Kernel broadcasts the exact linspace values -> bitwise identical.
    assert bool(jnp.array_equal(xg, xg_ref))
    assert bool(jnp.array_equal(yg, yg_ref))

    # Example input field Ein (complex64, shape (y_nodes, x_nodes))
    key = jax.random.PRNGKey(0)
    kr, ki = jax.random.split(key)
    Ein = (jax.random.normal(kr, (y_nodes, x_nodes), dtype=jnp.float32)
           + 1j * jax.random.normal(ki, (y_nodes, x_nodes), dtype=jnp.float32)
           ).astype(jnp.complex64)
    Eout = jax.block_until_ready(elem.forward(Ein))
    assert Eout.shape == Ein.shape and Eout.dtype == jnp.complex64

    print("KERNEL_OK")
</pallas_src>

<mosaic_0001>
module attributes {stable_mosaic.version = 11 : i64} {
  func.func @_meshgrid_broadcast_kernel(%arg0: i32, %arg1: memref<1x256xf32, #tpu.memory_space<vmem>>, %arg2: memref<8x1xf32, #tpu.memory_space<vmem>>, %arg3: memref<8x256xf32, #tpu.memory_space<vmem>>, %arg4: memref<8x256xf32, #tpu.memory_space<vmem>>) attributes {dimension_semantics = [#tpu.dimension_semantics<parallel>], iteration_bounds = array<i64: 4>, scalar_prefetch = 0 : i64, scratch_operands = 0 : i64, tpu.core_type = #tpu.core_type<tc>, window_params = [{pipeline_mode = #tpu.pipeline_mode<synchronous>, transform_indices = @transform_0, window_bounds = array<i64: 1, 256>}, {transform_indices = @transform_1, window_bounds = array<i64: 8, 1>}, {transform_indices = @transform_2, window_bounds = array<i64: 8, 256>}, {transform_indices = @transform_3, window_bounds = array<i64: 8, 256>}]} {
    %c0 = arith.constant 0 : index
    %c0_0 = arith.constant 0 : index
    %0 = vector.load %arg1[%c0, %c0_0] : memref<1x256xf32, #tpu.memory_space<vmem>>, vector<1x256xf32>
    %1 = vector.shape_cast %0 : vector<1x256xf32> to vector<1x256xf32>
    %2 = vector.broadcast %1 : vector<1x256xf32> to vector<8x256xf32>
    %c0_1 = arith.constant 0 : index
    %c0_2 = arith.constant 0 : index
    %3 = vector.load %arg3[%c0_1, %c0_2] : memref<8x256xf32, #tpu.memory_space<vmem>>, vector<8x256xf32>
    tpu.vector_store %arg3[%c0_1, %c0_2], %2 {strides = array<i32>} : memref<8x256xf32, #tpu.memory_space<vmem>>, vector<8x256xf32>,
    %c0_3 = arith.constant 0 : index
    %c0_4 = arith.constant 0 : index
    %4 = vector.load %arg2[%c0_3, %c0_4] : memref<8x1xf32, #tpu.memory_space<vmem>>, vector<8x1xf32>
    %5 = vector.shape_cast %4 : vector<8x1xf32> to vector<8x1xf32>
    %6 = vector.broadcast %5 : vector<8x1xf32> to vector<8x256xf32>
    %c0_5 = arith.constant 0 : index
    %c0_6 = arith.constant 0 : index
    %7 = vector.load %arg4[%c0_5, %c0_6] : memref<8x256xf32, #tpu.memory_space<vmem>>, vector<8x256xf32>
    tpu.vector_store %arg4[%c0_5, %c0_6], %6 {strides = array<i32>} : memref<8x256xf32, #tpu.memory_space<vmem>>, vector<8x256xf32>,
    return
  }
  func.func @transform_0(%arg0: i32) -> (i32, i32) {
    %c0_i32 = arith.constant 0 : i32
    %c0_i32_0 = arith.constant 0 : i32
    %c0_i32_1 = arith.constant 0 : i32
    return %c0_i32, %c0_i32_0 : i32, i32
  }
  func.func @transform_1(%arg0: i32) -> (i32, i32) {
    %c0_i32 = arith.constant 0 : i32
    %c0_i32_0 = arith.constant 0 : i32
    return %arg0, %c0_i32 : i32, i32
  }
  func.func @transform_2(%arg0: i32) -> (i32, i32) {
    %c0_i32 = arith.constant 0 : i32
    %c0_i32_0 = arith.constant 0 : i32
    return %arg0, %c0_i32 : i32, i32
  }
  func.func @transform_3(%arg0: i32) -> (i32, i32) {
    %c0_i32 = arith.constant 0 : i32
    %c0_i32_0 = arith.constant 0 : i32
    return %arg0, %c0_i32 : i32, i32
  }
}

</mosaic_0001>

<llo_original>
// kernel: tpu_custom_call.1
$region0: #{tpu_custom_call.1}
  #allocation0 [shape = 'u32[]', space=smem, size = 0x4, offset = 0x4, fixed_abs, tag = 'smem constant byte address 0x4 - core index']
  #allocation1 [shape = 'u32[72,128]{1,0:T(1,128)}', space=vmem, size = 0x9000, scoped, tag = 'internal scratch']
  %s0 = inlined_call_operand.vmem [shape: f32[1,256], index: 0, kind: input, shape index: {}]
  %s1 = inlined_call_operand.vmem [shape: f32[32,1], index: 1, kind: input, shape index: {}]
  %s2 = inlined_call_operand.hbm [shape: f32[32,256], index: 2, kind: output, shape index: {0}]
  %s3 = inlined_call_operand.hbm [shape: f32[32,256], index: 3, kind: output, shape index: {1}]
  %4 = xla_tuple %s2, %s3
  %s5 = sld [smem:[#allocation0]]
  $region49: #{tpu_custom_call.1} parent=0
    _
  %s7 = ssub.s32 1, %s5
  %s8 = scalar_select 0, %s7, %s5
  $region1: #{tpu_custom_call.1} parent=0
    #allocation2 [shape = 'u8[16384]{0}', space=vmem, size = 0x4000, scoped, tag = 'output window, operand 0']
    #allocation3 [shape = 's32[2]{0}', space=sflag, size = 0x8, scoped, tag = 'scoped memory for tpu_custom_call.1']
    #allocation4 [shape = 'u8[16384]{0}', space=vmem, size = 0x4000, scoped, tag = 'output window, operand 1']
    #allocation5 [shape = 's32[2]{0}', space=sflag, size = 0x8, scoped, tag = 'scoped memory for tpu_custom_call.1']
    %9 = vsyncpa [#allocation3], 0
    %s10 = scalar_lea.sflag [#allocation3], 1
    %11 = vsyncpa %s10, 0
    %12 = vsyncpa [#allocation5], 0
    %s13 = scalar_lea.sflag [#allocation5], 1
    %14 = vsyncpa %s13, 0
    loop: start=0, step=1, limit=6
    $region2: #{tpu_custom_call.1} parent=1 // loop_pre_header
      _
    $region3: #{tpu_custom_call.1} parent=1 // loop_header
      %s16 = sphi 0, %s20
      %p17 = scmp.ge.s32.totalorder %s16, 6
      %s24 = sphi 0, %s24
      %s26 = sphi 0, %s24
      %s27 = sphi 0, %s26
      %s41 = sphi 0, %s27
      %s47 = sphi 0, %s49
      %s50 = sphi 0, %s47
      %s51 = sphi 0, %s50
      %s67 = sphi 0, %s51
      %s73 = sphi 0, %s75
      %s76 = sphi 0, %s73
      %s77 = sphi 0, %s76
      %s93 = sphi 0, %s77
      %s99 = sphi 0, %s101
      %s102 = sphi 0, %s99
      %s103 = sphi 0, %s102
      %s119 = sphi 0, %s103
    $region4: #{tpu_custom_call.1} parent=1 // loop_header_branch
      %19 = sbr.rel (%p17) target = $region8
    $region5: #{tpu_custom_call.1} parent=1 // loop_body
      %s21 = ssub.s32 %s16, 1
      %s22 = ssub.s32 %s16, 2
      %s23 = sadd.s32 %s16, 1
      %s25 = sadd.s32 %s24, 1
      %p28 = scmp.eq.s32.totalorder %s16, 3
      %p29 = scmp.ne.s32.totalorder %s24, %s26
      %p30 = scmp.eq.s32.totalorder %s16, 0
      %p31 = por %p29, %p30
      %p32 = scmp.ne.s32.totalorder %s24, %s26
      %p33 = scmp.eq.s32.totalorder %s21, 3
      %p34 = por %p32, %p33
      %p35 = scmp.ne.s32.totalorder %s26, %s27
      %p36 = scmp.eq.s32.totalorder %s21, 0
      %p37 = por %p35, %p36
      %p38 = scmp.ne.s32.totalorder %s26, %s27
      %p39 = scmp.eq.s32.totalorder %s22, 3
      %p40 = por %p38, %p39
      %p42 = scmp.ne.s32.totalorder %s27, %s41
      %p43 = scmp.eq.s32.totalorder %s22, 0
      %p44 = por %p42, %p43
      %s45 = ssub.s32 %s16, %s23
      %p46 = scmp.eq.s32.totalorder %s45, 0
      %s48 = sadd.s32 %s47, 1
      %s49 = scalar_select %p46, %s47, %s48
      %p52 = pneg %p46
      %p53 = scmp.eq.s32.totalorder %s16, 3
      %p54 = por %p52, %p53
      %p55 = scmp.ne.s32.totalorder %s47, %s50
      %p56 = scmp.eq.s32.totalorder %s16, 0
      %p57 = por %p55, %p56
      %p58 = scmp.ne.s32.totalorder %s47, %s50
      %p59 = scmp.eq.s32.totalorder %s21, 3
      %p60 = por %p58, %p59
      %p61 = scmp.ne.s32.totalorder %s50, %s51
      %p62 = scmp.eq.s32.totalorder %s21, 0
      %p63 = por %p61, %p62
      %p64 = scmp.ne.s32.totalorder %s50, %s51
      %p65 = scmp.eq.s32.totalorder %s22, 3
      %p66 = por %p64, %p65
      %p68 = scmp.ne.s32.totalorder %s51, %s67
      %p69 = scmp.eq.s32.totalorder %s22, 0
      %p70 = por %p68, %p69
      %s71 = ssub.s32 %s16, %s23
      %p72 = scmp.eq.s32.totalorder %s71, 0
      %s74 = sadd.s32 %s73, 1
      %s75 = scalar_select %p72, %s73, %s74
      %p78 = pneg %p72
      %p79 = scmp.eq.s32.totalorder %s16, 3
      %p80 = por %p78, %p79
      %p81 = scmp.ne.s32.totalorder %s73, %s76
      %p82 = scmp.eq.s32.totalorder %s16, 0
      %p83 = por %p81, %p82
      %p84 = scmp.ne.s32.totalorder %s73, %s76
      %p85 = scmp.eq.s32.totalorder %s21, 3
      %p86 = por %p84, %p85
      %p87 = scmp.ne.s32.totalorder %s76, %s77
      %p88 = scmp.eq.s32.totalorder %s21, 0
      %p89 = por %p87, %p88
      %p90 = scmp.ne.s32.totalorder %s76, %s77
      %p91 = scmp.eq.s32.totalorder %s22, 3
      %p92 = por %p90, %p91
      %p94 = scmp.ne.s32.totalorder %s77, %s93
      %p95 = scmp.eq.s32.totalorder %s22, 0
      %p96 = por %p94, %p95
      %s97 = ssub.s32 %s16, %s23
      %p98 = scmp.eq.s32.totalorder %s97, 0
      %s100 = sadd.s32 %s99, 1
      %s101 = scalar_select %p98, %s99, %s100
      %p104 = pneg %p98
      %p105 = scmp.eq.s32.totalorder %s16, 3
      %p106 = por %p104, %p105
      %p107 = scmp.ne.s32.totalorder %s99, %s102
      %p108 = scmp.eq.s32.totalorder %s16, 0
      %p109 = por %p107, %p108
      %p110 = scmp.ne.s32.totalorder %s99, %s102
      %p111 = scmp.eq.s32.totalorder %s21, 3
      %p112 = por %p110, %p111
      %p113 = scmp.ne.s32.totalorder %s102, %s103
      %p114 = scmp.eq.s32.totalorder %s21, 0
      %p115 = por %p113, %p114
      %p116 = scmp.ne.s32.totalorder %s102, %s103
      %p117 = scmp.eq.s32.totalorder %s22, 3
      %p118 = por %p116, %p117
      %p120 = scmp.ne.s32.totalorder %s103, %s119
      %p121 = scmp.eq.s32.totalorder %s22, 0
      %p122 = por %p120, %p121
      %p123 = scmp.le.s32.totalorder 1, %s16
      %p124 = scmp.lt.s32.totalorder %s16, 5
      %p125 = pnand %p123, %p124
      %p126 = pneg %p125
      // Predicated region
      $region9: #{tpu_custom_call.1} parent=5 // pred_check
        _
      $region10: #{tpu_custom_call.1} parent=5 // pred_check_branch
        %128 = sbr.rel (%p125) target = $region12
      $region11: #{tpu_custom_call.1} parent=5 // pred_region
        %s129 = ssub.s32 %s16, 1
        // Predicated region
        $region13: #{tpu_custom_call.1} parent=11 // pred_check
          %p130 = pneg %p37
        $region14: #{tpu_custom_call.1} parent=11 // pred_check_branch
          %132 = sbr.rel (%p130) target = $region16
        $region15: #{tpu_custom_call.1} parent=11 // pred_region
          _
        $region16: #{tpu_custom_call.1} parent=11 // pred_fallthru
          _
      $region12: #{tpu_custom_call.1} parent=5 // pred_fallthru
        _
      %p133 = scmp.lt.s32.totalorder %s16, 4
      // Predicated region
      $region17: #{tpu_custom_call.1} parent=5 // pred_check
        %p134 = pneg %p133
      $region18: #{tpu_custom_call.1} parent=5 // pred_check_branch
        %136 = sbr.rel (%p134) target = $region20
      $region19: #{tpu_custom_call.1} parent=5 // pred_region
        // Predicated region
        $region21: #{tpu_custom_call.1} parent=19 // pred_check
          %p137 = pneg %p57
        $region22: #{tpu_custom_call.1} parent=19 // pred_check_branch
          %139 = sbr.rel (%p137) target = $region24
        $region23: #{tpu_custom_call.1} parent=19 // pred_region
          %p140 = scmp.lt.s32.totalorder %s16, 3
          %s141 = scalar_select %p140, %s16, 3
          %s142 = smul.addr %s141, 8
          %s143 = scalar_lea.vmem %s1, %s142
        $region24: #{tpu_custom_call.1} parent=19 // pred_fallthru
          _
      $region20: #{tpu_custom_call.1} parent=5 // pred_fallthru
        _
      %p144 = scmp.le.s32.totalorder 1, %s16
      %p145 = scmp.lt.s32.totalorder %s16, 5
      %p146 = pnand %p144, %p145
      %p147 = pneg %p146
      // Predicated region
      $region25: #{tpu_custom_call.1} parent=5 // pred_check
        _
      $region26: #{tpu_custom_call.1} parent=5 // pred_check_branch
        %149 = sbr.rel (%p146) target = $region28
      $region27: #{tpu_custom_call.1} parent=5 // pred_region
        %s150 = ssub.s32 %s16, 1
        %p151 = pneg %p37
        %p152 = pneg %p34
        %p153 = scmp.lt.s32.totalorder %s21, 3
        %s154 = scalar_select %p153, %s21, 3
        %s155 = smul.addr %s154, 8
        %s156 = scalar_lea.vmem %s1, %s155
        %p157 = pneg %p63
        %p158 = pneg %p60
        %p159 = pneg %p89
        %p160 = pneg %p86
        %s161 = sand.u32 %s76, 1
        %s162 = scalar_lea.sflag [#allocation3], %s161
        %s163 = sand.u32 %s76, 1
        %s164 = smul.addr %s163, 16
        %s165 = scalar_lea.vmem [#allocation2], %s164
        %p166 = pneg %p115
        %p167 = pneg %p112
        %s168 = sand.u32 %s102, 1
        %s169 = scalar_lea.sflag [#allocation5], %s168
        %s170 = sand.u32 %s102, 1
        %s171 = smul.addr %s170, 16
        %s172 = scalar_lea.vmem [#allocation4], %s171
        %p173 = scmp.lt.s32.totalorder %s21, 3
        %s174 = scalar_select %p173, %s21, 3
        %s175 = smul.addr %s174, 8
        %s176 = scalar_lea.vmem %s1, %s175
        %v177 = vld [vmem:[%s0] sm:$0x3]
        %v179 = vperm.slane %v177, 0
        %v180 = vperm.slane %v177, 1
        %183 = vst [vmem:[%s165] sm:$0xff] %v179
        %184 = vst [vmem:[%s165 + $0x8] sm:$0xff] %v180
        %v185 = vld [vmem:[%s176] sm:$0xff]
        %187 = vset.pattern.permute.xlu0 0
        %188 = vperm.xlu0 %187, %v185
        %v189 = vpop.permute.xlu0 %188
        %191 = vst [vmem:[%s172] sm:$0xff] %v189
        %192 = vst [vmem:[%s172 + $0x8] sm:$0xff] %v189
        %s193 = sand.u32 %s76, 1
        %s194 = scalar_lea.sflag [#allocation3], %s193
        %s195 = sand.u32 %s76, 1
        %s196 = smul.addr %s195, 16
        %s197 = scalar_lea.vmem [#allocation2], %s196
        %s198 = sand.u32 %s102, 1
        %s199 = scalar_lea.sflag [#allocation5], %s198
        %s200 = sand.u32 %s102, 1
        %s201 = smul.addr %s200, 16
        %s202 = scalar_lea.vmem [#allocation4], %s201
        // Predicated region
        $region29: #{tpu_custom_call.1} parent=27 // pred_check
          %p203 = pneg %p86
        $region30: #{tpu_custom_call.1} parent=27 // pred_check_branch
          %205 = sbr.rel (%p203) target = $region32
        $region31: #{tpu_custom_call.1} parent=27 // pred_region
          %207 = vsyncadd %s194, 0
          %s208 = smul.addr %s21, 2
          %s209 = smul.addr %s208, 8
          %s210 = scalar_lea.hbm %s2, %s209
          %s212 = sshll.u32 %s197, 4
          %s213 = int_to_ptr.vmem [resolvable:$true] %s212
          %s214 = sshll.u32 %s210, 4
          %s215 = int_to_ptr.hbm [resolvable:$true] %s214
          %217 = dma.vmem_to_hbm [thread:$0]  %s213, 256, %s215, %s194
        $region32: #{tpu_custom_call.1} parent=27 // pred_fallthru
          _
        // Predicated region
        $region33: #{tpu_custom_call.1} parent=27 // pred_check
          %p218 = pneg %p112
        $region34: #{tpu_custom_call.1} parent=27 // pred_check_branch
          %220 = sbr.rel (%p218) target = $region36
        $region35: #{tpu_custom_call.1} parent=27 // pred_region
          %222 = vsyncadd %s199, 0
          %s223 = smul.addr %s21, 2
          %s224 = smul.addr %s223, 8
          %s225 = scalar_lea.hbm %s3, %s224
          %s227 = sshll.u32 %s202, 4
          %s228 = int_to_ptr.vmem [resolvable:$true] %s227
          %s229 = sshll.u32 %s225, 4
          %s230 = int_to_ptr.hbm [resolvable:$true] %s229
          %232 = dma.vmem_to_hbm [thread:$0]  %s228, 256, %s230, %s199
        $region36: #{tpu_custom_call.1} parent=27 // pred_fallthru
          _
      $region28: #{tpu_custom_call.1} parent=5 // pred_fallthru
        _
      %p233 = scmp.le.s32.totalorder 2, %s16
      // Predicated region
      $region37: #{tpu_custom_call.1} parent=5 // pred_check
        %p234 = pneg %p233
      $region38: #{tpu_custom_call.1} parent=5 // pred_check_branch
        %236 = sbr.rel (%p234) target = $region40
      $region39: #{tpu_custom_call.1} parent=5 // pred_region
        %s237 = ssub.s32 %s16, 2
        // Predicated region
        $region41: #{tpu_custom_call.1} parent=39 // pred_check
          %p238 = pneg %p92
        $region42: #{tpu_custom_call.1} parent=39 // pred_check_branch
          %240 = sbr.rel (%p238) target = $region44
        $region43: #{tpu_custom_call.1} parent=39 // pred_region
          %s241 = sand.u32 %s77, 1
          %s242 = scalar_lea.sflag [#allocation3], %s241
          %s243 = sand.u32 %s77, 1
          %s244 = smul.addr %s243, 16
          %s245 = scalar_lea.vmem [#allocation2], %s244
          %247 = dma.done %s242, 256
        $region44: #{tpu_custom_call.1} parent=39 // pred_fallthru
          _
        // Predicated region
        $region45: #{tpu_custom_call.1} parent=39 // pred_check
          %p248 = pneg %p118
        $region46: #{tpu_custom_call.1} parent=39 // pred_check_branch
          %250 = sbr.rel (%p248) target = $region48
        $region47: #{tpu_custom_call.1} parent=39 // pred_region
          %s251 = sand.u32 %s103, 1
          %s252 = scalar_lea.sflag [#allocation5], %s251
          %s253 = sand.u32 %s103, 1
          %s254 = smul.addr %s253, 16
          %s255 = scalar_lea.vmem [#allocation4], %s254
          %257 = dma.done %s252, 256
        $region48: #{tpu_custom_call.1} parent=39 // pred_fallthru
          _
      $region40: #{tpu_custom_call.1} parent=5 // pred_fallthru
        _
    $region6: #{tpu_custom_call.1} parent=1 // loop_footer
      %s20 = sadd.s32 1, %s16
    $region7: #{tpu_custom_call.1} parent=1 // loop_footer_branch
      %15 = sbr.rel target = $region3
    $region8: #{tpu_custom_call.1} parent=1 // loop_exit
      _
    %258 = vsyncpa [#allocation3], 1
    %s259 = scalar_lea.sflag [#allocation3], 1
    %260 = vsyncpa %s259, 1
    %261 = vsyncpa [#allocation5], 1
    %s262 = scalar_lea.sflag [#allocation5], 1
    %263 = vsyncpa %s262, 1

</llo_original>
